<compile_context>
chip_gen: v6e
topology: v6e:2x2x1
jax: 0.10.0
libtpu: 0.0.40
codegen_flags: <defaults>
</compile_context>

<pallas_src>
import jax
import jax.numpy as jnp
from jax.experimental import pallas as pl
from jax.experimental.pallas import tpu as pltpu


# ------------------------------ helpers ---------------------------------------

def _round_up(x: int, m: int) -> int:
    return ((x + m - 1) // m) * m


# ----------------------------- Pallas kernel ----------------------------------

def _bmm_kernel(a_ref, b_ref, o_ref, acc_ref):
    # a_ref: (1, tm, tk), b_ref: (1, tk, tn), o_ref: (1, tm, tn)
    # acc_ref: (tm, tn) f32 accumulator, resident across the trailing K grid axis.
    @pl.when(pl.program_id(3) == 0)
    def _():
        acc_ref[...] = jnp.zeros_like(acc_ref)

    acc_ref[...] += jnp.dot(
        a_ref[0], b_ref[0], preferred_element_type=jnp.float32
    )

    @pl.when(pl.program_id(3) == pl.num_programs(3) - 1)
    def _():
        o_ref[0] = acc_ref[...].astype(o_ref.dtype)


def pallas_batched_einsum_bij_bjk_bik(a, b):
    """torch.einsum('bij,bjk->bik', a, b) on TPU via a tiled Pallas kernel."""
    B, M, K = a.shape
    B2, K2, N = b.shape
    assert B == B2 and K == K2, "shape mismatch for 'bij,bjk->bik'"
    out_dtype = jnp.result_type(a.dtype, b.dtype)

    # Tile selection: sublane axis (tm) multiple of 8, lane axes (tk, tn)
    # multiples of 128; capped at 256 which divides both MXU widths (128 on
    # v5e, 256 on v6e/v7x).  bf16/fp8 inputs get a deeper K tile (half the
    # bytes per element -> same VMEM footprint).
    in_bytes = max(jnp.dtype(a.dtype).itemsize, jnp.dtype(b.dtype).itemsize)
    tk_pref = 512 if in_bytes <= 2 else 256
    tm = min(256, _round_up(M, 8))
    tn = min(256, _round_up(N, 128))
    tk = min(tk_pref, _round_up(K, 128))

    # Zero-pad to tile multiples (zero K-padding is exact for matmul).
    Mp, Kp, Np = _round_up(M, tm), _round_up(K, tk), _round_up(N, tn)
    a_p = a if (Mp == M and Kp == K) else jnp.pad(
        a, ((0, 0), (0, Mp - M), (0, Kp - K)))
    b_p = b if (Kp == K and Np == N) else jnp.pad(
        b, ((0, 0), (0, Kp - K), (0, Np - N)))

    # K is the last grid axis so the f32 accumulator stays resident across it.
    grid = (B, Mp // tm, Np // tn, Kp // tk)

    cost = pl.CostEstimate(
        flops=2 * B * Mp * Np * Kp,
        transcendentals=0,
        bytes_accessed=(a_p.size * a_p.dtype.itemsize
                        + b_p.size * b_p.dtype.itemsize
                        + B * Mp * Np * jnp.dtype(out_dtype).itemsize),
    )

    out_p = pl.pallas_call(
        _bmm_kernel,
        out_shape=jax.ShapeDtypeStruct((B, Mp, Np), out_dtype),
        grid_spec=pltpu.PrefetchScalarGridSpec(
            num_scalar_prefetch=0,
            grid=grid,
            in_specs=[
                pl.BlockSpec((1, tm, tk), lambda bb, i, j, k: (bb, i, k)),
                pl.BlockSpec((1, tk, tn), lambda bb, i, j, k: (bb, k, j)),
            ],
            out_specs=pl.BlockSpec((1, tm, tn), lambda bb, i, j, k: (bb, i, j)),
            scratch_shapes=[pltpu.VMEM((tm, tn), jnp.float32)],
        ),
        compiler_params=pltpu.CompilerParams(
            # B / M / N are independent -> "parallel" (shards across the two
            # TensorCores on v7x); K is the reduction -> "arbitrary".
            dimension_semantics=("parallel", "parallel", "parallel", "arbitrary"),
            # Explicit scoped-VMEM budget: tiles above use < ~2 MiB double-
            # buffered, so the 32 MiB default is safe on every generation
            # (v7x has only 64 MiB physical).
            vmem_limit_bytes=32 * 1024 * 1024,
        ),
        cost_estimate=cost,
    )(a_p, b_p)

    if Mp != M or Np != N:
        out_p = out_p[:, :M, :N]
    return out_p


# --------------------------- UltEinsum wrapper --------------------------------

class UltEinsum:
    """JAX/Pallas port of the PyTorch UltEinsum module.

    mode 'r': einops-style rearrange (layout only, plain JAX glue).
    mode 'm': einsum multiplication; the 'bij,bjk->bik' hot path with
              lane-friendly dims (K, N >= 128) runs in the tiled Pallas MXU
              kernel; everything else falls back to XLA einsum.
    """

    def __init__(self, equation: str, mode: str = "m", **kwargs):
        if mode not in ("r", "m"):
            raise ValueError("Mode must be either 'r' or 'm'")
        self.equation = equation
        self.mode = mode
        self.kwargs = kwargs

    def __call__(self, *tensors):
        if self.mode == "r":
            if len(tensors) != 1:
                raise ValueError("Reshape mode ('r') requires exactly one input tensor")
            return self._reshape(tensors[0])
        return self._multiply(*tensors)

    # ---- mode 'r' -----------------------------------------------------------
    def _reshape(self, x):
        eq = self.equation.replace(" ", "")
        if eq == "bchw->b(hw)c":
            # [B, C, H, W] -> [B, H*W, C]
            B, C, H, W = x.shape
            return jnp.transpose(x, (0, 2, 3, 1)).reshape(B, H * W, C)
        # TODO(synk): general einops.rearrange pattern parsing not implemented;
        # only the pattern used in this script is supported.
        raise NotImplementedError(f"rearrange pattern not supported: {self.equation}")

    # ---- mode 'm' -----------------------------------------------------------
    def _multiply(self, *tensors):
        eq = self.equation.replace(" ", "")
        if eq == "bij,bjk->bik" and len(tensors) == 2:
            a, b = tensors
            _, _, K = a.shape
            _, _, N = b.shape
            # Tiny contraction / output dims (K or N < 128) are MXU-hostile:
            # K pads to 128 lanes (32x wasted load bandwidth for K=4) and
            # sub-128 N triggers masked partial stores, while the ~0.35 us
            # per-grid-step overhead dominates the tiny matmul.  XLA wins there.
            if K >= 128 and N >= 128:
                return pallas_batched_einsum_bij_bjk_bik(a, b)
            return jnp.einsum(self.equation, a, b)
        # TODO(synk): other einsum equations fall back to XLA einsum (not a
        # hand-written Pallas kernel).
        return jnp.einsum(self.equation, *tensors)

    @staticmethod
    def reshape(pattern, tensor, **kwargs):
        return UltEinsum(pattern, "r", **kwargs)(tensor)

    @staticmethod
    def multiply(equation, *tensors):
        return UltEinsum(equation, "m")(*tensors)


# ----------------------------------- main --------------------------------------

if __name__ == "__main__":
    key = jax.random.PRNGKey(0)
    k1, k2, k3, k4 = jax.random.split(key, 4)

    # ---- lane-friendly hot path: exercises the Pallas MXU kernel -------------
    # NCHW input with a 128-wide channel dim so the contraction (K=C=128) and
    # output (N=128) axes are lane-dense after the rearrange.
    B, C, H, W = 2, 128, 16, 16
    x = jax.random.normal(k1, (B, C, H, W), dtype=jnp.float32)
    N_out = 128
    w = jax.random.normal(k2, (B, C, N_out), dtype=jnp.float32)

    # mode 'r': rearrange NCHW -> [B, H*W, C]
    x_seq = UltEinsum.reshape("b c h w -> b (h w) c", x)      # [2, 256, 128]

    # mode 'm': batched matmul einsum on the MXU via the tiled Pallas kernel
    out = UltEinsum.multiply("bij,bjk->bik", x_seq, w)          # [2, 256, 128]
    out = jax.block_until_ready(out)

    ref = jnp.einsum("bij,bjk->bik", x_seq, w)
    assert out.shape == (B, H * W, N_out)
    # Loose-ish tolerance: both paths use the MXU's default f32 pass
    # decomposition, but accumulation details may differ slightly.
    assert jnp.allclose(out, ref, atol=2e-2, rtol=2e-2)

    # ---- tiny-K/N case (original demo shapes): dispatcher uses XLA fallback ---
    x2 = jax.random.normal(k3, (2, 4, 16, 16), dtype=jnp.float32)
    w2 = jax.random.normal(k4, (2, 4, 16), dtype=jnp.float32)
    x2_seq = UltEinsum.reshape("b c h w -> b (h w) c", x2)      # [2, 256, 4]
    out2 = jax.block_until_ready(UltEinsum.multiply("bij,bjk->bik", x2_seq, w2))
    ref2 = jnp.einsum("bij,bjk->bik", x2_seq, w2)
    assert out2.shape == (2, 256, 16)
    assert jnp.allclose(out2, ref2, atol=1e-5, rtol=1e-5)

    print("KERNEL_OK")
</pallas_src>

<mosaic_0001>
module attributes {stable_mosaic.version = 11 : i64} {
  func.func @_bmm_kernel(%arg0: i32, %arg1: i32, %arg2: i32, %arg3: i32, %arg4: memref<1x256x128xf32, #tpu.memory_space<vmem>>, %arg5: memref<1x128x128xf32, #tpu.memory_space<vmem>>, %arg6: memref<1x256x128xf32, #tpu.memory_space<vmem>>, %arg7: memref<256x128xf32, #tpu.memory_space<vmem>>) attributes {dimension_semantics = [#tpu.dimension_semantics<parallel>, #tpu.dimension_semantics<parallel>, #tpu.dimension_semantics<parallel>, #tpu.dimension_semantics<arbitrary>], iteration_bounds = array<i64: 2, 1, 1, 1>, scalar_prefetch = 0 : i64, scratch_operands = 1 : i64, tpu.core_type = #tpu.core_type<tc>, window_params = [{transform_indices = @transform_0, window_bounds = array<i64: 1, 256, 128>}, {transform_indices = @transform_1, window_bounds = array<i64: 1, 128, 128>}, {transform_indices = @transform_2, window_bounds = array<i64: 1, 256, 128>}]} {
    %c0_i32 = arith.constant 0 : i32
    %0 = arith.cmpi eq, %arg3, %c0_i32 : i32
    %1 = arith.extui %0 : i1 to i32
    %c0_i32_0 = arith.constant 0 : i32
    %2 = arith.cmpi ne, %1, %c0_i32_0 : i32
    scf.if %2 {
      %cst_12 = arith.constant 0.000000e+00 : f32
      %14 = vector.broadcast %cst_12 : f32 to vector<256x128xf32>
      %c0_13 = arith.constant 0 : index
      %c0_14 = arith.constant 0 : index
      %15 = vector.load %arg7[%c0_13, %c0_14] : memref<256x128xf32, #tpu.memory_space<vmem>>, vector<256x128xf32>
      tpu.vector_store %arg7[%c0_13, %c0_14], %14 {strides = array<i32>} : memref<256x128xf32, #tpu.memory_space<vmem>>, vector<256x128xf32>,
    } else {
    }
    %c0 = arith.constant 0 : index
    %c0_1 = arith.constant 0 : index
    %3 = vector.load %arg7[%c0, %c0_1] : memref<256x128xf32, #tpu.memory_space<vmem>>, vector<256x128xf32>
    %c0_2 = arith.constant 0 : index
    %c0_3 = arith.constant 0 : index
    %c0_4 = arith.constant 0 : index
    %4 = vector.load %arg4[%c0_2, %c0_3, %c0_4] : memref<1x256x128xf32, #tpu.memory_space<vmem>>, vector<1x256x128xf32>
    %5 = vector.shape_cast %4 : vector<1x256x128xf32> to vector<256x128xf32>
    %c0_5 = arith.constant 0 : index
    %c0_6 = arith.constant 0 : index
    %c0_7 = arith.constant 0 : index
    %6 = vector.load %arg5[%c0_5, %c0_6, %c0_7] : memref<1x128x128xf32, #tpu.memory_space<vmem>>, vector<1x128x128xf32>
    %7 = vector.shape_cast %6 : vector<1x128x128xf32> to vector<128x128xf32>
    %cst = arith.constant dense<0.000000e+00> : vector<256x128xf32>
    %8 = tpu.matmul %5, %7, %cst {dimension_numbers = #tpu.dot_dimension_numbers<[1], [0], [0], [1], [0, 0, 1, 1], [], []>} : vector<256x128xf32>, vector<128x128xf32>, vector<256x128xf32> -> vector<256x128xf32>
    %9 = arith.addf %3, %8 : vector<256x128xf32>
    %c0_8 = arith.constant 0 : index
    %c0_9 = arith.constant 0 : index
    %10 = vector.load %arg7[%c0_8, %c0_9] : memref<256x128xf32, #tpu.memory_space<vmem>>, vector<256x128xf32>
    tpu.vector_store %arg7[%c0_8, %c0_9], %9 {strides = array<i32>} : memref<256x128xf32, #tpu.memory_space<vmem>>, vector<256x128xf32>,
    %c0_i32_10 = arith.constant 0 : i32
    %11 = arith.cmpi eq, %arg3, %c0_i32_10 : i32
    %12 = arith.extui %11 : i1 to i32
    %c0_i32_11 = arith.constant 0 : i32
    %13 = arith.cmpi ne, %12, %c0_i32_11 : i32
    scf.if %13 {
      %c0_12 = arith.constant 0 : index
      %c0_13 = arith.constant 0 : index
      %14 = vector.load %arg7[%c0_12, %c0_13] : memref<256x128xf32, #tpu.memory_space<vmem>>, vector<256x128xf32>
      %c0_14 = arith.constant 0 : index
      %c0_15 = arith.constant 0 : index
      %c0_16 = arith.constant 0 : index
      %15 = vector.load %arg6[%c0_14, %c0_15, %c0_16] : memref<1x256x128xf32, #tpu.memory_space<vmem>>, vector<1x256x128xf32>
      %16 = vector.shape_cast %15 : vector<1x256x128xf32> to vector<256x128xf32>
      %17 = vector.shape_cast %14 : vector<256x128xf32> to vector<1x256x128xf32>
      tpu.vector_store %arg6[%c0_14, %c0_15, %c0_16], %17 {strides = array<i32>} : memref<1x256x128xf32, #tpu.memory_space<vmem>>, vector<1x256x128xf32>,
    } else {
    }
    return
  }
  func.func @transform_0(%arg0: i32, %arg1: i32, %arg2: i32, %arg3: i32) -> (i32, i32, i32) {
    %c0_i32 = arith.constant 0 : i32
    return %arg0, %arg1, %arg3 : i32, i32, i32
  }
  func.func @transform_1(%arg0: i32, %arg1: i32, %arg2: i32, %arg3: i32) -> (i32, i32, i32) {
    %c0_i32 = arith.constant 0 : i32
    return %arg0, %arg3, %arg2 : i32, i32, i32
  }
  func.func @transform_2(%arg0: i32, %arg1: i32, %arg2: i32, %arg3: i32) -> (i32, i32, i32) {
    %c0_i32 = arith.constant 0 : i32
    return %arg0, %arg1, %arg2 : i32, i32, i32
  }
}

</mosaic_0001>

<llo_original>
// kernel: tpu_custom_call.1
$region0: #{tpu_custom_call.1}
  #allocation0 [shape = 'u32[]', space=smem, size = 0x4, offset = 0x4, fixed_abs, tag = 'smem constant byte address 0x4 - core index']
  #allocation1 [shape = 'u32[144,128]{1,0:T(1,128)}', space=vmem, size = 0x12000, scoped, tag = 'internal scratch']
  #allocation2 [shape = 'f32[256,128]{1,0:T(8,128)}', space=vmem, size = 0x20000, scoped, tag = 'scratch operand']
  %s0 = inlined_call_operand.hbm [shape: f32[2,256,128], index: 0, kind: input, shape index: {}]
  %s1 = inlined_call_operand.hbm [shape: f32[2,128,128], index: 1, kind: input, shape index: {}]
  %s2 = inlined_call_operand.hbm [shape: f32[2,256,128], index: 2, kind: output, shape index: {}]
  %s3 = sld [smem:[#allocation0]]
  $region57: #{tpu_custom_call.1} parent=0
    _
  %s5 = ssub.s32 1, %s3
  %s6 = scalar_select 0, %s5, %s3
  $region1: #{tpu_custom_call.1} parent=0
    #allocation3 [shape = 'u8[262144]{0}', space=vmem, size = 0x40000, scoped, tag = 'input window, operand 0']
    #allocation4 [shape = 's32[2]{0}', space=sflag, size = 0x8, scoped, tag = 'scoped memory for tpu_custom_call.1']
    #allocation5 [shape = 's32[2]{0}', space=sflag, size = 0x8, scoped, tag = 'scoped memory for tpu_custom_call.1']
    #allocation6 [shape = 'u8[131072]{0}', space=vmem, size = 0x20000, scoped, tag = 'input window, operand 1']
    #allocation7 [shape = 's32[2]{0}', space=sflag, size = 0x8, scoped, tag = 'scoped memory for tpu_custom_call.1']
    #allocation8 [shape = 'u8[262144]{0}', space=vmem, size = 0x40000, scoped, tag = 'output window, operand 0']
    %7 = vsyncpa [#allocation4], 0
    %s8 = scalar_lea.sflag [#allocation4], 1
    %9 = vsyncpa %s8, 0
    %10 = vsyncpa [#allocation7], 0
    %s11 = scalar_lea.sflag [#allocation7], 1
    %12 = vsyncpa %s11, 0
    %13 = vsyncpa [#allocation5], 0
    %s14 = scalar_lea.sflag [#allocation5], 1
    %15 = vsyncpa %s14, 0
    loop: start=0, step=1, limit=4
    $region2: #{tpu_custom_call.1} parent=1 // loop_pre_header
      _
    $region3: #{tpu_custom_call.1} parent=1 // loop_header
      %s17 = sphi 0, %s21
      %p18 = scmp.ge.s32.totalorder %s17, 4
      %s24 = sphi 0, %s50
      %s25 = sphi 0, %s46
      %s26 = sphi 0, %s42
      %s27 = sphi 0, %s38
      %s28 = sphi 0, %s24
      %s29 = sphi 0, %s25
      %s30 = sphi 0, %s26
      %s31 = sphi 0, %s27
      %s32 = sphi 0, %s28
      %s33 = sphi 0, %s29
      %s34 = sphi 0, %s30
      %s35 = sphi 0, %s31
      %s57 = sphi 0, %s59
      %s60 = sphi 0, %s57
      %s61 = sphi 0, %s60
      %s77 = sphi 0, %s61
      %s87 = sphi 0, %s89
      %s90 = sphi 0, %s87
      %s91 = sphi 0, %s90
      %s107 = sphi 0, %s91
      %s117 = sphi 0, %s119
      %s120 = sphi 0, %s117
      %s121 = sphi 0, %s120
      %s137 = sphi 0, %s121
    $region4: #{tpu_custom_call.1} parent=1 // loop_header_branch
      %20 = sbr.rel (%p18) target = $region8
    $region5: #{tpu_custom_call.1} parent=1 // loop_body
      %s22 = ssub.s32 %s17, 1
      %s23 = ssub.s32 %s17, 2
      %s36 = sadd.s32 1, %s27
      %p37 = scmp.ge.s32.totalorder %s36, 1
      %s38 = scalar_select %p37, 0, %s36
      %s39 = sadd.s32 1, %s26
      %s40 = scalar_select %p37, %s39, %s26
      %p41 = scmp.ge.s32.totalorder %s40, 1
      %s42 = scalar_select %p41, 0, %s40
      %s43 = sadd.s32 1, %s25
      %s44 = scalar_select %p41, %s43, %s25
      %p45 = scmp.ge.s32.totalorder %s44, 1
      %s46 = scalar_select %p45, 0, %s44
      %s47 = sadd.s32 1, %s24
      %s48 = scalar_select %p45, %s47, %s24
      %p49 = scmp.ge.s32.totalorder %s48, 2
      %s50 = scalar_select %p49, 0, %s48
      %s51 = ssub.s32 %s24, %s50
      %s52 = ssub.s32 %s25, %s46
      %s53 = sor.u32 %s51, %s52
      %s54 = ssub.s32 %s27, %s38
      %s55 = sor.u32 %s53, %s54
      %p56 = scmp.eq.s32.totalorder %s55, 0
      %s58 = sadd.s32 %s57, 1
      %s59 = scalar_select %p56, %s57, %s58
      %p62 = pneg %p56
      %p63 = scmp.eq.s32.totalorder %s17, 1
      %p64 = por %p62, %p63
      %p65 = scmp.ne.s32.totalorder %s57, %s60
      %p66 = scmp.eq.s32.totalorder %s17, 0
      %p67 = por %p65, %p66
      %p68 = scmp.ne.s32.totalorder %s57, %s60
      %p69 = scmp.eq.s32.totalorder %s22, 1
      %p70 = por %p68, %p69
      %p71 = scmp.ne.s32.totalorder %s60, %s61
      %p72 = scmp.eq.s32.totalorder %s22, 0
      %p73 = por %p71, %p72
      %p74 = scmp.ne.s32.totalorder %s60, %s61
      %p75 = scmp.eq.s32.totalorder %s23, 1
      %p76 = por %p74, %p75
      %p78 = scmp.ne.s32.totalorder %s61, %s77
      %p79 = scmp.eq.s32.totalorder %s23, 0
      %p80 = por %p78, %p79
      %s81 = ssub.s32 %s24, %s50
      %s82 = ssub.s32 %s27, %s38
      %s83 = sor.u32 %s81, %s82
      %s84 = ssub.s32 %s26, %s42
      %s85 = sor.u32 %s83, %s84
      %p86 = scmp.eq.s32.totalorder %s85, 0
      %s88 = sadd.s32 %s87, 1
      %s89 = scalar_select %p86, %s87, %s88
      %p92 = pneg %p86
      %p93 = scmp.eq.s32.totalorder %s17, 1
      %p94 = por %p92, %p93
      %p95 = scmp.ne.s32.totalorder %s87, %s90
      %p96 = scmp.eq.s32.totalorder %s17, 0
      %p97 = por %p95, %p96
      %p98 = scmp.ne.s32.totalorder %s87, %s90
      %p99 = scmp.eq.s32.totalorder %s22, 1
      %p100 = por %p98, %p99
      %p101 = scmp.ne.s32.totalorder %s90, %s91
      %p102 = scmp.eq.s32.totalorder %s22, 0
      %p103 = por %p101, %p102
      %p104 = scmp.ne.s32.totalorder %s90, %s91
      %p105 = scmp.eq.s32.totalorder %s23, 1
      %p106 = por %p104, %p105
      %p108 = scmp.ne.s32.totalorder %s91, %s107
      %p109 = scmp.eq.s32.totalorder %s23, 0
      %p110 = por %p108, %p109
      %s111 = ssub.s32 %s24, %s50
      %s112 = ssub.s32 %s25, %s46
      %s113 = sor.u32 %s111, %s112
      %s114 = ssub.s32 %s26, %s42
      %s115 = sor.u32 %s113, %s114
      %p116 = scmp.eq.s32.totalorder %s115, 0
      %s118 = sadd.s32 %s117, 1
      %s119 = scalar_select %p116, %s117, %s118
      %p122 = pneg %p116
      %p123 = scmp.eq.s32.totalorder %s17, 1
      %p124 = por %p122, %p123
      %p125 = scmp.ne.s32.totalorder %s117, %s120
      %p126 = scmp.eq.s32.totalorder %s17, 0
      %p127 = por %p125, %p126
      %p128 = scmp.ne.s32.totalorder %s117, %s120
      %p129 = scmp.eq.s32.totalorder %s22, 1
      %p130 = por %p128, %p129
      %p131 = scmp.ne.s32.totalorder %s120, %s121
      %p132 = scmp.eq.s32.totalorder %s22, 0
      %p133 = por %p131, %p132
      %p134 = scmp.ne.s32.totalorder %s120, %s121
      %p135 = scmp.eq.s32.totalorder %s23, 1
      %p136 = por %p134, %p135
      %p138 = scmp.ne.s32.totalorder %s121, %s137
      %p139 = scmp.eq.s32.totalorder %s23, 0
      %p140 = por %p138, %p139
      %p141 = scmp.le.s32.totalorder 1, %s17
      %p142 = scmp.lt.s32.totalorder %s17, 3
      %p143 = pnand %p141, %p142
      %p144 = pneg %p143
      // Predicated region
      $region9: #{tpu_custom_call.1} parent=5 // pred_check
        _
      $region10: #{tpu_custom_call.1} parent=5 // pred_check_branch
        %146 = sbr.rel (%p143) target = $region12
      $region11: #{tpu_custom_call.1} parent=5 // pred_region
        %s147 = ssub.s32 %s17, 1
      $region12: #{tpu_custom_call.1} parent=5 // pred_fallthru
        _
      %p148 = scmp.lt.s32.totalorder %s17, 2
      // Predicated region
      $region13: #{tpu_custom_call.1} parent=5 // pred_check
        %p149 = pneg %p148
      $region14: #{tpu_custom_call.1} parent=5 // pred_check_branch
        %151 = sbr.rel (%p149) target = $region16
      $region15: #{tpu_custom_call.1} parent=5 // pred_region
        // Predicated region
        $region17: #{tpu_custom_call.1} parent=15 // pred_check
          %p152 = pneg %p67
        $region18: #{tpu_custom_call.1} parent=15 // pred_check_branch
          %154 = sbr.rel (%p152) target = $region20
        $region19: #{tpu_custom_call.1} parent=15 // pred_region
          %s155 = sand.u32 %s57, 1
          %s156 = scalar_lea.sflag [#allocation4], %s155
          %s157 = sand.u32 %s57, 1
          %s158 = smul.addr %s157, 256
          %s159 = scalar_lea.vmem [#allocation3], %s158
          %s160 = smul.u32 32, %s25
          %s162 = ssub.s32 4096, 4096
          %163 = vsyncadd %s156, %s162
          %s164 = sadd.s32 %s27, %s160
          %s165 = smul.addr %s24, 32
          %s166 = sadd.s32 %s164, %s165
          %s167 = smul.addr %s166, 128
          %s168 = scalar_lea.hbm %s0, %s167
          %s169 = sshll.u32 %s159, 4
          %s170 = int_to_ptr.vmem [resolvable:$true] %s169
          %175 = dma.hbm_to_vmem [thread:$0]  %s168, 4096, %s170, %s156, 128, 128, 8
        $region20: #{tpu_custom_call.1} parent=15 // pred_fallthru
          _
        // Predicated region
        $region21: #{tpu_custom_call.1} parent=15 // pred_check
          %p176 = pneg %p97
        $region22: #{tpu_custom_call.1} parent=15 // pred_check_branch
          %178 = sbr.rel (%p176) target = $region24
        $region23: #{tpu_custom_call.1} parent=15 // pred_region
          %s179 = sand.u32 %s87, 1
          %s180 = scalar_lea.sflag [#allocation7], %s179
          %s181 = sand.u32 %s87, 1
          %s182 = smul.addr %s181, 128
          %s183 = scalar_lea.vmem [#allocation6], %s182
          %s184 = smul.u32 16, %s27
          %s186 = ssub.s32 2048, 2048
          %187 = vsyncadd %s180, %s186
          %s188 = sadd.s32 %s26, %s184
          %s189 = smul.addr %s24, 16
          %s190 = sadd.s32 %s188, %s189
          %s191 = smul.addr %s190, 128
          %s192 = scalar_lea.hbm %s1, %s191
          %s193 = sshll.u32 %s183, 4
          %s194 = int_to_ptr.vmem [resolvable:$true] %s193
          %199 = dma.hbm_to_vmem [thread:$0]  %s192, 2048, %s194, %s180, 128, 128, 8
        $region24: #{tpu_custom_call.1} parent=15 // pred_fallthru
          _
      $region16: #{tpu_custom_call.1} parent=5 // pred_fallthru
        _
      %p200 = scmp.le.s32.totalorder 1, %s17
      %p201 = scmp.lt.s32.totalorder %s17, 3
      %p202 = pnand %p200, %p201
      %p203 = pneg %p202
      // Predicated region
      $region25: #{tpu_custom_call.1} parent=5 // pred_check
        _
      $region26: #{tpu_custom_call.1} parent=5 // pred_check_branch
        %205 = sbr.rel (%p202) target = $region28
      $region27: #{tpu_custom_call.1} parent=5 // pred_region
        %s206 = ssub.s32 %s17, 1
        %s207 = sand.u32 %s60, 1
        %s208 = scalar_lea.sflag [#allocation4], %s207
        %s209 = sand.u32 %s60, 1
        %s210 = smul.addr %s209, 256
        %s211 = scalar_lea.vmem [#allocation3], %s210
        // Predicated region
        $region29: #{tpu_custom_call.1} parent=27 // pred_check
          %p212 = pneg %p73
        $region30: #{tpu_custom_call.1} parent=27 // pred_check_branch
          %214 = sbr.rel (%p212) target = $region32
        $region31: #{tpu_custom_call.1} parent=27 // pred_region
          %215 = dma.done %s208, 4096
        $region32: #{tpu_custom_call.1} parent=27 // pred_fallthru
          _
        %s216 = sand.u32 %s90, 1
        %s217 = scalar_lea.sflag [#allocation7], %s216
        %s218 = sand.u32 %s90, 1
        %s219 = smul.addr %s218, 128
        %s220 = scalar_lea.vmem [#allocation6], %s219
        // Predicated region
        $region33: #{tpu_custom_call.1} parent=27 // pred_check
          %p221 = pneg %p103
        $region34: #{tpu_custom_call.1} parent=27 // pred_check_branch
          %223 = sbr.rel (%p221) target = $region36
        $region35: #{tpu_custom_call.1} parent=27 // pred_region
          %224 = dma.done %s217, 2048
        $region36: #{tpu_custom_call.1} parent=27 // pred_fallthru
          _
        %s225 = sand.u32 %s60, 1
        %s226 = scalar_lea.sflag [#allocation4], %s225
        %s227 = sand.u32 %s60, 1
        %s228 = smul.addr %s227, 256
        %s229 = scalar_lea.vmem [#allocation3], %s228
        %p230 = pneg %p73
        %p231 = pneg %p70
        %s232 = sand.u32 %s90, 1
        %s233 = scalar_lea.sflag [#allocation7], %s232
        %s234 = sand.u32 %s90, 1
        %s235 = smul.addr %s234, 128
        %s236 = scalar_lea.vmem [#allocation6], %s235
        %p237 = pneg %p103
        %p238 = pneg %p100
        %p239 = pneg %p133
        %p240 = pneg %p130
        %s241 = sand.u32 %s120, 1
        %s242 = scalar_lea.sflag [#allocation5], %s241
        %s243 = sand.u32 %s120, 1
        %s244 = smul.addr %s243, 256
        %s245 = scalar_lea.vmem [#allocation8], %s244
        %s246 = smul.u32 32, %s29
        %s247 = smul.u32 16, %s31
        %s248 = smul.u32 32, %s29
        %p249 = scmp.eq.s32.totalorder %s31, 0
        // Predicated region
        $region37: #{tpu_custom_call.1} parent=27 // pred_check
          %p250 = pneg %p249
        $region38: #{tpu_custom_call.1} parent=27 // pred_check_branch
          %252 = sbr.rel (%p250) target = $region40
        $region39: #{tpu_custom_call.1} parent=27 // pred_region
          %253 = vst [vmem:[#allocation2] sm:$0xff] 0.0
          %254 = vst [vmem:[#allocation2 + $0x8] sm:$0xff] 0.0
          %255 = vst [vmem:[#allocation2 + $0x10] sm:$0xff] 0.0
          %256 = vst [vmem:[#allocation2 + $0x18] sm:$0xff] 0.0
          %257 = vst [vmem:[#allocation2 + $0x20] sm:$0xff] 0.0
          %258 = vst [vmem:[#allocation2 + $0x28] sm:$0xff] 0.0
          %259 = vst [vmem:[#allocation2 + $0x30] sm:$0xff] 0.0
          %260 = vst [vmem:[#allocation2 + $0x38] sm:$0xff] 0.0
          %261 = vst [vmem:[#allocation2 + $0x40] sm:$0xff] 0.0
          %262 = vst [vmem:[#allocation2 + $0x48] sm:$0xff] 0.0
          %263 = vst [vmem:[#allocation2 + $0x50] sm:$0xff] 0.0
          %264 = vst [vmem:[#allocation2 + $0x58] sm:$0xff] 0.0
          %265 = vst [vmem:[#allocation2 + $0x60] sm:$0xff] 0.0
          %266 = vst [vmem:[#allocation2 + $0x68] sm:$0xff] 0.0
          %267 = vst [vmem:[#allocation2 + $0x70] sm:$0xff] 0.0
          %268 = vst [vmem:[#allocation2 + $0x78] sm:$0xff] 0.0
          %269 = vst [vmem:[#allocation2 + $0x80] sm:$0xff] 0.0
          %270 = vst [vmem:[#allocation2 + $0x88] sm:$0xff] 0.0
          %271 = vst [vmem:[#allocation2 + $0x90] sm:$0xff] 0.0
          %272 = vst [vmem:[#allocation2 + $0x98] sm:$0xff] 0.0
          %273 = vst [vmem:[#allocation2 + $0xa0] sm:$0xff] 0.0
          %274 = vst [vmem:[#allocation2 + $0xa8] sm:$0xff] 0.0
          %275 = vst [vmem:[#allocation2 + $0xb0] sm:$0xff] 0.0
          %276 = vst [vmem:[#allocation2 + $0xb8] sm:$0xff] 0.0
          %277 = vst [vmem:[#allocation2 + $0xc0] sm:$0xff] 0.0
          %278 = vst [vmem:[#allocation2 + $0xc8] sm:$0xff] 0.0
          %279 = vst [vmem:[#allocation2 + $0xd0] sm:$0xff] 0.0
          %280 = vst [vmem:[#allocation2 + $0xd8] sm:$0xff] 0.0
          %281 = vst [vmem:[#allocation2 + $0xe0] sm:$0xff] 0.0
          %282 = vst [vmem:[#allocation2 + $0xe8] sm:$0xff] 0.0
          %283 = vst [vmem:[#allocation2 + $0xf0] sm:$0xff] 0.0
          %284 = vst [vmem:[#allocation2 + $0xf8] sm:$0xff] 0.0
        $region40: #{tpu_custom_call.1} parent=27 // pred_fallthru
          _
        %v285 = vld [vmem:[#allocation2] sm:$0xff]
        %v286 = vld [vmem:[#allocation2 + $0x8] sm:$0xff]
        %v287 = vld [vmem:[#allocation2 + $0x10] sm:$0xff]
        %v288 = vld [vmem:[#allocation2 + $0x18] sm:$0xff]
        %v289 = vld [vmem:[#allocation2 + $0x20] sm:$0xff]
        %v290 = vld [vmem:[#allocation2 + $0x28] sm:$0xff]
        %v291 = vld [vmem:[#allocation2 + $0x30] sm:$0xff]
        %v292 = vld [vmem:[#allocation2 + $0x38] sm:$0xff]
        %v293 = vld [vmem:[#allocation2 + $0x40] sm:$0xff]
        %v294 = vld [vmem:[#allocation2 + $0x48] sm:$0xff]
        %v295 = vld [vmem:[#allocation2 + $0x50] sm:$0xff]
        %v296 = vld [vmem:[#allocation2 + $0x58] sm:$0xff]
        %v297 = vld [vmem:[#allocation2 + $0x60] sm:$0xff]
        %v298 = vld [vmem:[#allocation2 + $0x68] sm:$0xff]
        %v299 = vld [vmem:[#allocation2 + $0x70] sm:$0xff]
        %v300 = vld [vmem:[#allocation2 + $0x78] sm:$0xff]
        %v301 = vld [vmem:[#allocation2 + $0x80] sm:$0xff]
        %v302 = vld [vmem:[#allocation2 + $0x88] sm:$0xff]
        %v303 = vld [vmem:[#allocation2 + $0x90] sm:$0xff]
        %v304 = vld [vmem:[#allocation2 + $0x98] sm:$0xff]
        %v305 = vld [vmem:[#allocation2 + $0xa0] sm:$0xff]
        %v306 = vld [vmem:[#allocation2 + $0xa8] sm:$0xff]
        %v307 = vld [vmem:[#allocation2 + $0xb0] sm:$0xff]
        %v308 = vld [vmem:[#allocation2 + $0xb8] sm:$0xff]
        %v309 = vld [vmem:[#allocation2 + $0xc0] sm:$0xff]
        %v310 = vld [vmem:[#allocation2 + $0xc8] sm:$0xff]
        %v311 = vld [vmem:[#allocation2 + $0xd0] sm:$0xff]
        %v312 = vld [vmem:[#allocation2 + $0xd8] sm:$0xff]
        %v313 = vld [vmem:[#allocation2 + $0xe0] sm:$0xff]
        %v314 = vld [vmem:[#allocation2 + $0xe8] sm:$0xff]
        %v315 = vld [vmem:[#allocation2 + $0xf0] sm:$0xff]
        %v316 = vld [vmem:[#allocation2 + $0xf8] sm:$0xff]
        %v317 = vld [vmem:[%s211] sm:$0xff]
        %v318 = vld [vmem:[%s211 + $0x8] sm:$0xff]
        %v319 = vld [vmem:[%s211 + $0x10] sm:$0xff]
        %v320 = vld [vmem:[%s211 + $0x18] sm:$0xff]
        %v321 = vld [vmem:[%s211 + $0x20] sm:$0xff]
        %v322 = vld [vmem:[%s211 + $0x28] sm:$0xff]
        %v323 = vld [vmem:[%s211 + $0x30] sm:$0xff]
        %v324 = vld [vmem:[%s211 + $0x38] sm:$0xff]
        %v325 = vld [vmem:[%s211 + $0x40] sm:$0xff]
        %v326 = vld [vmem:[%s211 + $0x48] sm:$0xff]
        %v327 = vld [vmem:[%s211 + $0x50] sm:$0xff]
        %v328 = vld [vmem:[%s211 + $0x58] sm:$0xff]
        %v329 = vld [vmem:[%s211 + $0x60] sm:$0xff]
        %v330 = vld [vmem:[%s211 + $0x68] sm:$0xff]
        %v331 = vld [vmem:[%s211 + $0x70] sm:$0xff]
        %v332 = vld [vmem:[%s211 + $0x78] sm:$0xff]
        %v333 = vld [vmem:[%s211 + $0x80] sm:$0xff]
        %v334 = vld [vmem:[%s211 + $0x88] sm:$0xff]
        %v335 = vld [vmem:[%s211 + $0x90] sm:$0xff]
        %v336 = vld [vmem:[%s211 + $0x98] sm:$0xff]
        %v337 = vld [vmem:[%s211 + $0xa0] sm:$0xff]
        %v338 = vld [vmem:[%s211 + $0xa8] sm:$0xff]
        %v339 = vld [vmem:[%s211 + $0xb0] sm:$0xff]
        %v340 = vld [vmem:[%s211 + $0xb8] sm:$0xff]
        %v341 = vld [vmem:[%s211 + $0xc0] sm:$0xff]
        %v342 = vld [vmem:[%s211 + $0xc8] sm:$0xff]
        %v343 = vld [vmem:[%s211 + $0xd0] sm:$0xff]
        %v344 = vld [vmem:[%s211 + $0xd8] sm:$0xff]
        %v345 = vld [vmem:[%s211 + $0xe0] sm:$0xff]
        %v346 = vld [vmem:[%s211 + $0xe8] sm:$0xff]
        %v347 = vld [vmem:[%s211 + $0xf0] sm:$0xff]
        %v348 = vld [vmem:[%s211 + $0xf8] sm:$0xff]
        %v349 = vld [vmem:[%s220] sm:$0xff]
        %v350 = vld [vmem:[%s220 + $0x8] sm:$0xff]
        %v351 = vld [vmem:[%s220 + $0x10] sm:$0xff]
        %v352 = vld [vmem:[%s220 + $0x18] sm:$0xff]
        %v353 = vld [vmem:[%s220 + $0x20] sm:$0xff]
        %v354 = vld [vmem:[%s220 + $0x28] sm:$0xff]
        %v355 = vld [vmem:[%s220 + $0x30] sm:$0xff]
        %v356 = vld [vmem:[%s220 + $0x38] sm:$0xff]
        %v357 = vld [vmem:[%s220 + $0x40] sm:$0xff]
        %v358 = vld [vmem:[%s220 + $0x48] sm:$0xff]
        %v359 = vld [vmem:[%s220 + $0x50] sm:$0xff]
        %v360 = vld [vmem:[%s220 + $0x58] sm:$0xff]
        %v361 = vld [vmem:[%s220 + $0x60] sm:$0xff]
        %v362 = vld [vmem:[%s220 + $0x68] sm:$0xff]
        %v363 = vld [vmem:[%s220 + $0x70] sm:$0xff]
        %v364 = vld [vmem:[%s220 + $0x78] sm:$0xff]
        %365 = vmatprep.subr.mxu0 0.0
        %366 = vmatpush1.msra.mxu0 %v364
        %367 = vmatprep.subr.mxu0 0.0
        %368 = vmatpush1.msra.mxu0 %v363
        %369 = vmatprep.subr.mxu0 0.0
        %370 = vmatpush1.msra.mxu0 %v362
        %371 = vmatprep.subr.mxu0 0.0
        %372 = vmatpush1.msra.mxu0 %v361
        %373 = vmatprep.subr.mxu0 0.0
        %374 = vmatpush1.msra.mxu0 %v360
        %375 = vmatprep.subr.mxu0 0.0
        %376 = vmatpush1.msra.mxu0 %v359
        %377 = vmatprep.subr.mxu0 0.0
        %378 = vmatpush1.msra.mxu0 %v358
        %379 = vmatprep.subr.mxu0 0.0
        %380 = vmatpush1.msra.mxu0 %v357
        %381 = vmatprep.subr.mxu0 0.0
        %382 = vmatpush1.msra.mxu0 %v356
        %383 = vmatprep.subr.mxu0 0.0
        %384 = vmatpush1.msra.mxu0 %v355
        %385 = vmatprep.subr.mxu0 0.0
        %386 = vmatpush1.msra.mxu0 %v354
        %387 = vmatprep.subr.mxu0 0.0
        %388 = vmatpush1.msra.mxu0 %v353
        %389 = vmatprep.subr.mxu0 0.0
        %390 = vmatpush1.msra.mxu0 %v352
        %391 = vmatprep.subr.mxu0 0.0
        %392 = vmatpush1.msra.mxu0 %v351
        %393 = vmatprep.subr.mxu0 0.0
        %394 = vmatpush1.msra.mxu0 %v350
        %395 = vmatprep.subr.mxu0 0.0
        %396 = vmatpush1.msra.mxu0 %v349
        %397 = vmatprep.subr.mxu0 0.0
        %398 = vmatpush2.msra.mxu0 0.0
        %399 = vmatprep.subr.mxu0 0.0
        %400 = vmatpush2.msra.mxu0 0.0
        %401 = vmatprep.subr.mxu0 0.0
        %402 = vmatpush2.msra.mxu0 0.0
        %403 = vmatprep.subr.mxu0 0.0
        %404 = vmatpush2.msra.mxu0 0.0
        %405 = vmatprep.subr.mxu0 0.0
        %406 = vmatpush2.msra.mxu0 0.0
        %407 = vmatprep.subr.mxu0 0.0
        %408 = vmatpush2.msra.mxu0 0.0
        %409 = vmatprep.subr.mxu0 0.0
        %410 = vmatpush2.msra.mxu0 0.0
        %411 = vmatprep.subr.mxu0 0.0
        %412 = vmatpush2.msra.mxu0 0.0
        %413 = vmatprep.subr.mxu0 0.0
        %414 = vmatpush2.msra.mxu0 0.0
        %415 = vmatprep.subr.mxu0 0.0
        %416 = vmatpush2.msra.mxu0 0.0
        %417 = vmatprep.subr.mxu0 0.0
        %418 = vmatpush2.msra.mxu0 0.0
        %419 = vmatprep.subr.mxu0 0.0
        %420 = vmatpush2.msra.mxu0 0.0
        %421 = vmatprep.subr.mxu0 0.0
        %422 = vmatpush2.msra.mxu0 0.0
        %423 = vmatprep.subr.mxu0 0.0
        %424 = vmatpush2.msra.mxu0 0.0
        %425 = vmatprep.subr.mxu0 0.0
        %426 = vmatpush2.msra.mxu0 0.0
        %427 = vmatprep.subr.mxu0 0.0
        %428 = vmatpush2.msra.mxu0 0.0
        %429 = vmatprep.mubr.f32.mxu0 0.0
        %430 = vmatmul.mubr.f32.gmra.mxu0 %v317
        %v431 = vpop.f32.mrf.mxu0
        %v432 = vadd.f32 0.0, %v431
        %v433 = vpop.f32.mrf.mxu0
        %434 = vmatprep.mubr.f32.mxu0 0.0
        %435 = vmatmul.mubr.f32.gmra.mxu0 %v318
        %v436 = vpop.f32.mrf.mxu0
        %v437 = vadd.f32 0.0, %v436
        %v438 = vpop.f32.mrf.mxu0
        %439 = vmatprep.mubr.f32.mxu0 0.0
        %440 = vmatmul.mubr.f32.gmra.mxu0 %v319
        %v441 = vpop.f32.mrf.mxu0
        %v442 = vadd.f32 0.0, %v441
        %v443 = vpop.f32.mrf.mxu0
        %444 = vmatprep.mubr.f32.mxu0 0.0
        %445 = vmatmul.mubr.f32.gmra.mxu0 %v320
        %v446 = vpop.f32.mrf.mxu0
        %v447 = vadd.f32 0.0, %v446
        %v448 = vpop.f32.mrf.mxu0
        %449 = vmatprep.mubr.f32.mxu0 0.0
        %450 = vmatmul.mubr.f32.gmra.mxu0 %v321
        %v451 = vpop.f32.mrf.mxu0
        %v452 = vadd.f32 0.0, %v451
        %v453 = vpop.f32.mrf.mxu0
        %454 = vmatprep.mubr.f32.mxu0 0.0
        %455 = vmatmul.mubr.f32.gmra.mxu0 %v322
        %v456 = vpop.f32.mrf.mxu0
        %v457 = vadd.f32 0.0, %v456
        %v458 = vpop.f32.mrf.mxu0
        %459 = vmatprep.mubr.f32.mxu0 0.0
        %460 = vmatmul.mubr.f32.gmra.mxu0 %v323
        %v461 = vpop.f32.mrf.mxu0
        %v462 = vadd.f32 0.0, %v461
        %v463 = vpop.f32.mrf.mxu0
        %464 = vmatprep.mubr.f32.mxu0 0.0
        %465 = vmatmul.mubr.f32.gmra.mxu0 %v324
        %v466 = vpop.f32.mrf.mxu0
        %v467 = vadd.f32 0.0, %v466
        %v468 = vpop.f32.mrf.mxu0
        %469 = vmatprep.mubr.f32.mxu0 0.0
        %470 = vmatmul.mubr.f32.gmra.mxu0 %v325
        %v471 = vpop.f32.mrf.mxu0
        %v472 = vadd.f32 0.0, %v471
        %v473 = vpop.f32.mrf.mxu0
        %474 = vmatprep.mubr.f32.mxu0 0.0
        %475 = vmatmul.mubr.f32.gmra.mxu0 %v326
        %v476 = vpop.f32.mrf.mxu0
        %v477 = vadd.f32 0.0, %v476
        %v478 = vpop.f32.mrf.mxu0
        %479 = vmatprep.mubr.f32.mxu0 0.0
        %480 = vmatmul.mubr.f32.gmra.mxu0 %v327
        %v481 = vpop.f32.mrf.mxu0
        %v482 = vadd.f32 0.0, %v481
        %v483 = vpop.f32.mrf.mxu0
        %484 = vmatprep.mubr.f32.mxu0 0.0
        %485 = vmatmul.mubr.f32.gmra.mxu0 %v328
        %v486 = vpop.f32.mrf.mxu0
        %v487 = vadd.f32 0.0, %v486
        %v488 = vpop.f32.mrf.mxu0
        %489 = vmatprep.mubr.f32.mxu0 0.0
        %490 = vmatmul.mubr.f32.gmra.mxu0 %v329
        %v491 = vpop.f32.mrf.mxu0
        %v492 = vadd.f32 0.0, %v491
        %v493 = vpop.f32.mrf.mxu0
        %494 = vmatprep.mubr.f32.mxu0 0.0
        %495 = vmatmul.mubr.f32.gmra.mxu0 %v330
        %v496 = vpop.f32.mrf.mxu0
        %v497 = vadd.f32 0.0, %v496
        %v498 = vpop.f32.mrf.mxu0
        %499 = vmatprep.mubr.f32.mxu0 0.0
        %500 = vmatmul.mubr.f32.gmra.mxu0 %v331
        %v501 = vpop.f32.mrf.mxu0
        %v502 = vadd.f32 0.0, %v501
        %v503 = vpop.f32.mrf.mxu0
        %504 = vmatprep.mubr.f32.mxu0 0.0
        %505 = vmatmul.mubr.f32.gmra.mxu0 %v332
        %v506 = vpop.f32.mrf.mxu0
        %v507 = vadd.f32 0.0, %v506
        %v508 = vpop.f32.mrf.mxu0
        %509 = vmatprep.mubr.f32.mxu0 0.0
        %510 = vmatmul.mubr.f32.gmra.mxu0 %v333
        %v511 = vpop.f32.mrf.mxu0
        %v512 = vadd.f32 0.0, %v511
        %v513 = vpop.f32.mrf.mxu0
        %514 = vmatprep.mubr.f32.mxu0 0.0
        %515 = vmatmul.mubr.f32.gmra.mxu0 %v334
        %v516 = vpop.f32.mrf.mxu0
        %v517 = vadd.f32 0.0, %v516
        %v518 = vpop.f32.mrf.mxu0
        %519 = vmatprep.mubr.f32.mxu0 0.0
        %520 = vmatmul.mubr.f32.gmra.mxu0 %v335
        %v521 = vpop.f32.mrf.mxu0
        %v522 = vadd.f32 0.0, %v521
        %v523 = vpop.f32.mrf.mxu0
        %524 = vmatprep.mubr.f32.mxu0 0.0
        %525 = vmatmul.mubr.f32.gmra.mxu0 %v336
        %v526 = vpop.f32.mrf.mxu0
        %v527 = vadd.f32 0.0, %v526
        %v528 = vpop.f32.mrf.mxu0
        %529 = vmatprep.mubr.f32.mxu0 0.0
        %530 = vmatmul.mubr.f32.gmra.mxu0 %v337
        %v531 = vpop.f32.mrf.mxu0
        %v532 = vadd.f32 0.0, %v531
        %v533 = vpop.f32.mrf.mxu0
        %534 = vmatprep.mubr.f32.mxu0 0.0
        %535 = vmatmul.mubr.f32.gmra.mxu0 %v338
        %v536 = vpop.f32.mrf.mxu0
        %v537 = vadd.f32 0.0, %v536
        %v538 = vpop.f32.mrf.mxu0
        %539 = vmatprep.mubr.f32.mxu0 0.0
        %540 = vmatmul.mubr.f32.gmra.mxu0 %v339
        %v541 = vpop.f32.mrf.mxu0
        %v542 = vadd.f32 0.0, %v541
        %v543 = vpop.f32.mrf.mxu0
        %544 = vmatprep.mubr.f32.mxu0 0.0
        %545 = vmatmul.mubr.f32.gmra.mxu0 %v340
        %v546 = vpop.f32.mrf.mxu0
        %v547 = vadd.f32 0.0, %v546
        %v548 = vpop.f32.mrf.mxu0
        %549 = vmatprep.mubr.f32.mxu0 0.0
        %550 = vmatmul.mubr.f32.gmra.mxu0 %v341
        %v551 = vpop.f32.mrf.mxu0
        %v552 = vadd.f32 0.0, %v551
        %v553 = vpop.f32.mrf.mxu0
        %554 = vmatprep.mubr.f32.mxu0 0.0
        %555 = vmatmul.mubr.f32.gmra.mxu0 %v342
        %v556 = vpop.f32.mrf.mxu0
        %v557 = vadd.f32 0.0, %v556
        %v558 = vpop.f32.mrf.mxu0
        %559 = vmatprep.mubr.f32.mxu0 0.0
        %560 = vmatmul.mubr.f32.gmra.mxu0 %v343
        %v561 = vpop.f32.mrf.mxu0
        %v562 = vadd.f32 0.0, %v561
        %v563 = vpop.f32.mrf.mxu0
        %564 = vmatprep.mubr.f32.mxu0 0.0
        %565 = vmatmul.mubr.f32.gmra.mxu0 %v344
        %v566 = vpop.f32.mrf.mxu0
        %v567 = vadd.f32 0.0, %v566
        %v568 = vpop.f32.mrf.mxu0
        %569 = vmatprep.mubr.f32.mxu0 0.0
        %570 = vmatmul.mubr.f32.gmra.mxu0 %v345
        %v571 = vpop.f32.mrf.mxu0
        %v572 = vadd.f32 0.0, %v571
        %v573 = vpop.f32.mrf.mxu0
        %574 = vmatprep.mubr.f32.mxu0 0.0
        %575 = vmatmul.mubr.f32.gmra.mxu0 %v346
        %v576 = vpop.f32.mrf.mxu0
        %v577 = vadd.f32 0.0, %v576
        %v578 = vpop.f32.mrf.mxu0
        %579 = vmatprep.mubr.f32.mxu0 0.0
        %580 = vmatmul.mubr.f32.gmra.mxu0 %v347
        %v581 = vpop.f32.mrf.mxu0
        %v582 = vadd.f32 0.0, %v581
        %v583 = vpop.f32.mrf.mxu0
        %584 = vmatprep.mubr.f32.mxu0 0.0
        %585 = vmatmul.mubr.f32.gmra.mxu0 %v348
        %v586 = vpop.f32.mrf.mxu0
        %v587 = vadd.f32 0.0, %v586
        %v588 = vpop.f32.mrf.mxu0
        %589 = vdwg.mxu0
        %v590 = vadd.f32 %v285, %v432
        %v591 = vadd.f32 %v286, %v437
        %v592 = vadd.f32 %v287, %v442
        %v593 = vadd.f32 %v288, %v447
        %v594 = vadd.f32 %v289, %v452
        %v595 = vadd.f32 %v290, %v457
        %v596 = vadd.f32 %v291, %v462
        %v597 = vadd.f32 %v292, %v467
        %v598 = vadd.f32 %v293, %v472
        %v599 = vadd.f32 %v294, %v477
        %v600 = vadd.f32 %v295, %v482
        %v601 = vadd.f32 %v296, %v487
        %v602 = vadd.f32 %v297, %v492
        %v603 = vadd.f32 %v298, %v497
        %v604 = vadd.f32 %v299, %v502
        %v605 = vadd.f32 %v300, %v507
        %v606 = vadd.f32 %v301, %v512
        %v607 = vadd.f32 %v302, %v517
        %v608 = vadd.f32 %v303, %v522
        %v609 = vadd.f32 %v304, %v527
        %v610 = vadd.f32 %v305, %v532
        %v611 = vadd.f32 %v306, %v537
        %v612 = vadd.f32 %v307, %v542
        %v613 = vadd.f32 %v308, %v547
        %v614 = vadd.f32 %v309, %v552
        %v615 = vadd.f32 %v310, %v557
        %v616 = vadd.f32 %v311, %v562
        %v617 = vadd.f32 %v312, %v567
        %v618 = vadd.f32 %v313, %v572
        %v619 = vadd.f32 %v314, %v577
        %v620 = vadd.f32 %v315, %v582
        %v621 = vadd.f32 %v316, %v587
        %622 = vst [vmem:[#allocation2] sm:$0xff] %v590
        %623 = vst [vmem:[#allocation2 + $0x8] sm:$0xff] %v591
        %624 = vst [vmem:[#allocation2 + $0x10] sm:$0xff] %v592
        %625 = vst [vmem:[#allocation2 + $0x18] sm:$0xff] %v593
        %626 = vst [vmem:[#allocation2 + $0x20] sm:$0xff] %v594
        %627 = vst [vmem:[#allocation2 + $0x28] sm:$0xff] %v595
        %628 = vst [vmem:[#allocation2 + $0x30] sm:$0xff] %v596
        %629 = vst [vmem:[#allocation2 + $0x38] sm:$0xff] %v597
        %630 = vst [vmem:[#allocation2 + $0x40] sm:$0xff] %v598
        %631 = vst [vmem:[#allocation2 + $0x48] sm:$0xff] %v599
        %632 = vst [vmem:[#allocation2 + $0x50] sm:$0xff] %v600
        %633 = vst [vmem:[#allocation2 + $0x58] sm:$0xff] %v601
        %634 = vst [vmem:[#allocation2 + $0x60] sm:$0xff] %v602
        %635 = vst [vmem:[#allocation2 + $0x68] sm:$0xff] %v603
        %636 = vst [vmem:[#allocation2 + $0x70] sm:$0xff] %v604
        %637 = vst [vmem:[#allocation2 + $0x78] sm:$0xff] %v605
        %638 = vst [vmem:[#allocation2 + $0x80] sm:$0xff] %v606
        %639 = vst [vmem:[#allocation2 + $0x88] sm:$0xff] %v607
        %640 = vst [vmem:[#allocation2 + $0x90] sm:$0xff] %v608
        %641 = vst [vmem:[#allocation2 + $0x98] sm:$0xff] %v609
        %642 = vst [vmem:[#allocation2 + $0xa0] sm:$0xff] %v610
        %643 = vst [vmem:[#allocation2 + $0xa8] sm:$0xff] %v611
        %644 = vst [vmem:[#allocation2 + $0xb0] sm:$0xff] %v612
        %645 = vst [vmem:[#allocation2 + $0xb8] sm:$0xff] %v613
        %646 = vst [vmem:[#allocation2 + $0xc0] sm:$0xff] %v614
        %647 = vst [vmem:[#allocation2 + $0xc8] sm:$0xff] %v615
        %648 = vst [vmem:[#allocation2 + $0xd0] sm:$0xff] %v616
        %649 = vst [vmem:[#allocation2 + $0xd8] sm:$0xff] %v617
        %650 = vst [vmem:[#allocation2 + $0xe0] sm:$0xff] %v618
        %651 = vst [vmem:[#allocation2 + $0xe8] sm:$0xff] %v619
        %652 = vst [vmem:[#allocation2 + $0xf0] sm:$0xff] %v620
        %653 = vst [vmem:[#allocation2 + $0xf8] sm:$0xff] %v621
        // Predicated region
        $region41: #{tpu_custom_call.1} parent=27 // pred_check
          %p654 = pneg %p249
        $region42: #{tpu_custom_call.1} parent=27 // pred_check_branch
          %656 = sbr.rel (%p654) target = $region44
        $region43: #{tpu_custom_call.1} parent=27 // pred_region
          %v657 = vld [vmem:[#allocation2] sm:$0xff]
          %v658 = vld [vmem:[#allocation2 + $0x8] sm:$0xff]
          %v659 = vld [vmem:[#allocation2 + $0x10] sm:$0xff]
          %v660 = vld [vmem:[#allocation2 + $0x18] sm:$0xff]
          %v661 = vld [vmem:[#allocation2 + $0x20] sm:$0xff]
          %v662 = vld [vmem:[#allocation2 + $0x28] sm:$0xff]
          %v663 = vld [vmem:[#allocation2 + $0x30] sm:$0xff]
          %v664 = vld [vmem:[#allocation2 + $0x38] sm:$0xff]
          %v665 = vld [vmem:[#allocation2 + $0x40] sm:$0xff]
          %v666 = vld [vmem:[#allocation2 + $0x48] sm:$0xff]
          %v667 = vld [vmem:[#allocation2 + $0x50] sm:$0xff]
          %v668 = vld [vmem:[#allocation2 + $0x58] sm:$0xff]
          %v669 = vld [vmem:[#allocation2 + $0x60] sm:$0xff]
          %v670 = vld [vmem:[#allocation2 + $0x68] sm:$0xff]
          %v671 = vld [vmem:[#allocation2 + $0x70] sm:$0xff]
          %v672 = vld [vmem:[#allocation2 + $0x78] sm:$0xff]
          %v673 = vld [vmem:[#allocation2 + $0x80] sm:$0xff]
          %v674 = vld [vmem:[#allocation2 + $0x88] sm:$0xff]
          %v675 = vld [vmem:[#allocation2 + $0x90] sm:$0xff]
          %v676 = vld [vmem:[#allocation2 + $0x98] sm:$0xff]
          %v677 = vld [vmem:[#allocation2 + $0xa0] sm:$0xff]
          %v678 = vld [vmem:[#allocation2 + $0xa8] sm:$0xff]
          %v679 = vld [vmem:[#allocation2 + $0xb0] sm:$0xff]
          %v680 = vld [vmem:[#allocation2 + $0xb8] sm:$0xff]
          %v681 = vld [vmem:[#allocation2 + $0xc0] sm:$0xff]
          %v682 = vld [vmem:[#allocation2 + $0xc8] sm:$0xff]
          %v683 = vld [vmem:[#allocation2 + $0xd0] sm:$0xff]
          %v684 = vld [vmem:[#allocation2 + $0xd8] sm:$0xff]
          %v685 = vld [vmem:[#allocation2 + $0xe0] sm:$0xff]
          %v686 = vld [vmem:[#allocation2 + $0xe8] sm:$0xff]
          %v687 = vld [vmem:[#allocation2 + $0xf0] sm:$0xff]
          %v688 = vld [vmem:[#allocation2 + $0xf8] sm:$0xff]
          %689 = vst [vmem:[%s245] sm:$0xff] %v657
          %690 = vst [vmem:[%s245 + $0x8] sm:$0xff] %v658
          %691 = vst [vmem:[%s245 + $0x10] sm:$0xff] %v659
          %692 = vst [vmem:[%s245 + $0x18] sm:$0xff] %v660
          %693 = vst [vmem:[%s245 + $0x20] sm:$0xff] %v661
          %694 = vst [vmem:[%s245 + $0x28] sm:$0xff] %v662
          %695 = vst [vmem:[%s245 + $0x30] sm:$0xff] %v663
          %696 = vst [vmem:[%s245 + $0x38] sm:$0xff] %v664
          %697 = vst [vmem:[%s245 + $0x40] sm:$0xff] %v665
          %698 = vst [vmem:[%s245 + $0x48] sm:$0xff] %v666
          %699 = vst [vmem:[%s245 + $0x50] sm:$0xff] %v667
          %700 = vst [vmem:[%s245 + $0x58] sm:$0xff] %v668
          %701 = vst [vmem:[%s245 + $0x60] sm:$0xff] %v669
          %702 = vst [vmem:[%s245 + $0x68] sm:$0xff] %v670
          %703 = vst [vmem:[%s245 + $0x70] sm:$0xff] %v671
          %704 = vst [vmem:[%s245 + $0x78] sm:$0xff] %v672
          %705 = vst [vmem:[%s245 + $0x80] sm:$0xff] %v673
          %706 = vst [vmem:[%s245 + $0x88] sm:$0xff] %v674
          %707 = vst [vmem:[%s245 + $0x90] sm:$0xff] %v675
          %708 = vst [vmem:[%s245 + $0x98] sm:$0xff] %v676
          %709 = vst [vmem:[%s245 + $0xa0] sm:$0xff] %v677
          %710 = vst [vmem:[%s245 + $0xa8] sm:$0xff] %v678
          %711 = vst [vmem:[%s245 + $0xb0] sm:$0xff] %v679
          %712 = vst [vmem:[%s245 + $0xb8] sm:$0xff] %v680
          %713 = vst [vmem:[%s245 + $0xc0] sm:$0xff] %v681
          %714 = vst [vmem:[%s245 + $0xc8] sm:$0xff] %v682
          %715 = vst [vmem:[%s245 + $0xd0] sm:$0xff] %v683
          %716 = vst [vmem:[%s245 + $0xd8] sm:$0xff] %v684
          %717 = vst [vmem:[%s245 + $0xe0] sm:$0xff] %v685
          %718 = vst [vmem:[%s245 + $0xe8] sm:$0xff] %v686
          %719 = vst [vmem:[%s245 + $0xf0] sm:$0xff] %v687
          %720 = vst [vmem:[%s245 + $0xf8] sm:$0xff] %v688
        $region44: #{tpu_custom_call.1} parent=27 // pred_fallthru
          _
        %s721 = sand.u32 %s120, 1
        %s722 = scalar_lea.sflag [#allocation5], %s721
        %s723 = sand.u32 %s120, 1
        %s724 = smul.addr %s723, 256
        %s725 = scalar_lea.vmem [#allocation8], %s724
        // Predicated region
        $region45: #{tpu_custom_call.1} parent=27 // pred_check
          %p726 = pneg %p130
        $region46: #{tpu_custom_call.1} parent=27 // pred_check_branch
          %728 = sbr.rel (%p726) target = $region48
        $region47: #{tpu_custom_call.1} parent=27 // pred_region
          %s729 = smul.u32 32, %s29
          %s731 = ssub.s32 4096, 4096
          %732 = vsyncadd %s722, %s731
          %s733 = sadd.s32 %s30, %s729
          %s734 = smul.addr %s28, 32
          %s735 = sadd.s32 %s733, %s734
          %s736 = smul.addr %s735, 128
          %s737 = scalar_lea.hbm %s2, %s736
          %s738 = sshll.u32 %s725, 4
          %s739 = int_to_ptr.vmem [resolvable:$true] %s738
          %744 = dma.vmem_to_hbm [thread:$0]  %s739, 4096, %s737, %s722, 128, 128, 8
        $region48: #{tpu_custom_call.1} parent=27 // pred_fallthru
          _
      $region28: #{tpu_custom_call.1} parent=5 // pred_fallthru
        _
      %p745 = scmp.le.s32.totalorder 2, %s17
      // Predicated region
      $region49: #{tpu_custom_call.1} parent=5 // pred_check
        %p746 = pneg %p745
      $region50: #{tpu_custom_call.1} parent=5 // pred_check_branch
        %748 = sbr.rel (%p746) target = $region52
      $region51: #{tpu_custom_call.1} parent=5 // pred_region
        %s749 = ssub.s32 %s17, 2
        // Predicated region
        $region53: #{tpu_custom_call.1} parent=51 // pred_check
          %p750 = pneg %p136
        $region54: #{tpu_custom_call.1} parent=51 // pred_check_branch
          %752 = sbr.rel (%p750) target = $region56
        $region55: #{tpu_custom_call.1} parent=51 // pred_region
          %s753 = sand.u32 %s121, 1
          %s754 = scalar_lea.sflag [#allocation5], %s753
          %s755 = sand.u32 %s121, 1
          %s756 = smul.addr %s755, 256
          %s757 = scalar_lea.vmem [#allocation8], %s756
          %758 = dma.done %s754, 4096
        $region56: #{tpu_custom_call.1} parent=51 // pred_fallthru
          _
      $region52: #{tpu_custom_call.1} parent=5 // pred_fallthru
        _
    $region6: #{tpu_custom_call.1} parent=1 // loop_footer
      %s21 = sadd.s32 1, %s17
    $region7: #{tpu_custom_call.1} parent=1 // loop_footer_branch
      %16 = sbr.rel target = $region3
    $region8: #{tpu_custom_call.1} parent=1 // loop_exit
      _
    %759 = vsyncpa [#allocation4], 1
    %s760 = scalar_lea.sflag [#allocation4], 1
    %761 = vsyncpa %s760, 1
    %762 = vsyncpa [#allocation7], 1
    %s763 = scalar_lea.sflag [#allocation7], 1
    %764 = vsyncpa %s763, 1
    %765 = vsyncpa [#allocation5], 1
    %s766 = scalar_lea.sflag [#allocation5], 1
    %767 = vsyncpa %s766, 1

</llo_original>
